<compile_context>
chip_gen: v6e
topology: v6e:2x2x1
jax: 0.10.0
libtpu: 0.0.40
codegen_flags: <defaults>
</compile_context>

<pallas_src>
import functools

import jax
import jax.numpy as jnp
from jax import lax
from jax.experimental import pallas as pl
from jax.experimental.pallas import tpu as pltpu


def _silu(x):
    return x * jax.nn.sigmoid(x)


def _round_up(x, m):
    return ((x + m - 1) // m) * m


def edge_mlp_kernel(idx_ref, tab_ref, b1_ref, w2_ref, b2_ref, w3_ref, b3_ref,
                    out_ref):
    """Fused gather + edge MLP, transposed layout (features x edges).

    idx_ref : [2, TE]       int32  row0 = sender id, row1 = receiver id + n_pad
    tab_ref : [D, 2*n_pad]  f32    [w1a @ node^T | w1b @ node^T]
    b1_ref  : [D, 1]        f32
    w2_ref  : [D/2, D]      f32
    b2_ref  : [D/2, 1]      f32
    w3_ref  : [D/2, 1]      f32
    b3_ref  : [1, 1]        f32
    out_ref : [1, TE]       f32    sigmoid(edge value), lane-dense
    """
    two_n = tab_ref.shape[1]
    te = idx_ref.shape[1]

    idx = idx_ref[...]                                          # [2, TE] int32
    iota = lax.broadcasted_iota(jnp.int32, (two_n, te), 0)      # [2N, TE]
    # One 1 in the sender half and one in the (shifted) receiver half of each
    # column -> a single K=2N matmul does gather + Linear(2D->D) at once.
    onehot = jnp.logical_or(iota == idx[0:1, :],
                            iota == idx[1:2, :]).astype(jnp.bfloat16)

    h = (jnp.dot(tab_ref[...].astype(jnp.bfloat16), onehot,
                 preferred_element_type=jnp.float32)
         + b1_ref[...])                                         # [D, TE] f32
    h = _silu(h)

    # dropout (eval mode) -> identity

    # Linear(D -> D/2) + SiLU; cast only the MXU operands to bf16.
    h2 = (jnp.dot(w2_ref[...].astype(jnp.bfloat16), h.astype(jnp.bfloat16),
                  preferred_element_type=jnp.float32)
          + b2_ref[...])                                        # [D/2, TE] f32
    h2 = _silu(h2)

    # Linear(D/2 -> 1) as VPU mul + sublane reduce -> already lane-dense [1,TE].
    v = jnp.sum(h2 * w3_ref[...], axis=0, keepdims=True) + b3_ref[...]
    out_ref[...] = jax.nn.sigmoid(v)


def init_edge_encoder_params(key, input_dim, std=0.1):
    """Mirrors init_network_weights: N(0, std) weights, 0 bias.

    Weights stored in torch.nn.Linear orientation ([out, in]); the first layer
    is split into sender/receiver halves; biases are column vectors.
    """
    k1a, k1b, k2, k3 = jax.random.split(key, 4)
    d = input_dim
    half = d // 2
    return {
        "w1a": jax.random.normal(k1a, (d, d), jnp.float32) * std,
        "w1b": jax.random.normal(k1b, (d, d), jnp.float32) * std,
        "b1": jnp.zeros((d, 1), jnp.float32),
        "w2": jax.random.normal(k2, (half, d), jnp.float32) * std,
        "b2": jnp.zeros((half, 1), jnp.float32),
        "w3": jax.random.normal(k3, (half, 1), jnp.float32) * std,
        "b3": jnp.zeros((1, 1), jnp.float32),
    }


@functools.partial(jax.jit, static_argnames=("tile_e",))
def edge_encoder_forward(node_inputs, edge_index, params, tile_e=8192):
    """
    node_inputs : [node_size, input_dim] float32
    edge_index  : [2, edge_size] int32
    returns     : [edge_size] float32  (new edge weights in (0, 1))
    """
    n, d = node_inputs.shape
    assert d % 2 == 0, "input_dim must be even (Linear(input_dim, input_dim//2))"
    half = d // 2
    e_size = edge_index.shape[1]
    if e_size == 0:
        return jnp.zeros((0,), jnp.float32)

    n_pad = _round_up(n, 8)
    two_n = 2 * n_pad

    # --- edge tiling -------------------------------------------------------
    # VMEM-aware cap on the edge tile (v7x has only 64 MiB physical VMEM).
    bytes_per_edge = (
        2 * 4 * 2          # idx block, double-buffered
        + 4 * 2            # out block, double-buffered
        + two_n * (4 + 2 + 1)   # iota i32 + onehot bf16 + bool compare
        + d * (4 + 2)           # h f32 + bf16 copy for the layer-2 operand
        + half * 4              # h2 f32
        + 16                    # slack
    )
    vmem_budget = 32 * 1024 * 1024
    te_vmem = max(128, (vmem_budget // bytes_per_edge) // 128 * 128)

    e_need = _round_up(e_size, 128)
    te = max(128, min(_round_up(tile_e, 128), e_need, te_vmem))
    e_pad = _round_up(e_size, te)
    # Keep >= 2 grid steps when there is enough work so the "parallel" edge
    # axis can shard across v7x's two TensorCores.
    if e_pad // te < 2 and e_need >= 256:
        te = max(128, min(_round_up((e_need + 1) // 2, 128), te_vmem))
        e_pad = _round_up(e_size, te)

    # --- glue: tiny per-node layer-1 partial table + shifted indices --------
    node_t = node_inputs.astype(jnp.float32).T                  # [D, N]
    ta = params["w1a"] @ node_t                                 # [D, N]
    tb = params["w1b"] @ node_t                                 # [D, N]
    if n_pad != n:
        ta = jnp.pad(ta, ((0, 0), (0, n_pad - n)))
        tb = jnp.pad(tb, ((0, 0), (0, n_pad - n)))
    tab = jnp.concatenate([ta, tb], axis=1)                     # [D, 2*n_pad]

    idx = jnp.stack([edge_index[0],
                     edge_index[1] + n_pad]).astype(jnp.int32)  # [2, E]
    if e_pad != e_size:
        idx = jnp.pad(idx, ((0, 0), (0, e_pad - e_size)))       # padded: node 0

    grid = (e_pad // te,)
    const = lambda i: (0, 0)   # weights/biases/table: constant-index -> resident

    flops = e_pad * (2 * d * two_n + 2 * half * d + 2 * half)
    transcendentals = e_pad * (d + half + 1)
    bytes_accessed = (e_pad * (2 * 4 + 4)                       # idx in + out
                      + d * two_n * 4 + d * 4                   # table + b1
                      + half * d * 4 + half * 4 + half * 4 + 4) # w2,b2,w3,b3

    out = pl.pallas_call(
        edge_mlp_kernel,
        out_shape=jax.ShapeDtypeStruct((1, e_pad), jnp.float32),
        grid_spec=pltpu.PrefetchScalarGridSpec(
            num_scalar_prefetch=0,
            grid=grid,
            in_specs=[
                pl.BlockSpec((2, te), lambda i: (0, i)),        # edge indices
                pl.BlockSpec((d, two_n), const),                # fused layer-1 table
                pl.BlockSpec((d, 1), const),                    # b1
                pl.BlockSpec((half, d), const),                 # w2
                pl.BlockSpec((half, 1), const),                 # b2
                pl.BlockSpec((half, 1), const),                 # w3 (column)
                pl.BlockSpec((1, 1), const),                    # b3
            ],
            out_specs=pl.BlockSpec((1, te), lambda i: (0, i)),
        ),
        compiler_params=pltpu.CompilerParams(
            dimension_semantics=("parallel",),
            vmem_limit_bytes=48 * 1024 * 1024,
        ),
        cost_estimate=pl.CostEstimate(
            flops=flops,
            transcendentals=transcendentals,
            bytes_accessed=bytes_accessed),
    )(idx, tab, params["b1"], params["w2"], params["b2"],
      params["w3"], params["b3"])

    return out[0, :e_size]   # squeeze, drop padding


def edge_encoder_ref(node_inputs, edge_index, params):
    """Pure-JAX f32 reference for correctness checking."""
    senders = jnp.take(node_inputs, edge_index[0], axis=0)      # [E, D]
    receivers = jnp.take(node_inputs, edge_index[1], axis=0)    # [E, D]
    h = _silu(senders @ params["w1a"].T + receivers @ params["w1b"].T
              + params["b1"][:, 0])
    h2 = _silu(h @ params["w2"].T + params["b2"][:, 0])
    v = jax.nn.sigmoid(h2 @ params["w3"] + params["b3"][0])
    return v[:, 0]


if __name__ == "__main__":
    input_dim = 32
    node_size = 16
    edge_size = 64

    key = jax.random.PRNGKey(0)
    k_node, k_edge, k_param = jax.random.split(key, 3)

    node_inputs = jax.random.normal(k_node, (node_size, input_dim), jnp.float32)
    edge_index = jax.random.randint(k_edge, (2, edge_size), 0, node_size,
                                    dtype=jnp.int32)
    params = init_edge_encoder_params(k_param, input_dim, std=0.1)

    out = edge_encoder_forward(node_inputs, edge_index, params)
    out = jax.block_until_ready(out)

    ref = edge_encoder_ref(node_inputs, edge_index, params)
    assert out.shape == (edge_size,), out.shape
    # bf16 MXU operands with f32 accumulation -> loosened tolerance vs f32 ref.
    assert jnp.allclose(out, ref, atol=1e-2, rtol=1e-2), \
        f"mismatch: max abs err {jnp.max(jnp.abs(out - ref))}"

    print("KERNEL_OK")
</pallas_src>

<mosaic_0001>
module attributes {stable_mosaic.version = 11 : i64} {
  func.func @edge_mlp_kernel(%arg0: i32, %arg1: memref<2x128xi32, #tpu.memory_space<vmem>>, %arg2: memref<32x32xf32, #tpu.memory_space<vmem>>, %arg3: memref<32x1xf32, #tpu.memory_space<vmem>>, %arg4: memref<16x32xf32, #tpu.memory_space<vmem>>, %arg5: memref<16x1xf32, #tpu.memory_space<vmem>>, %arg6: memref<16x1xf32, #tpu.memory_space<vmem>>, %arg7: memref<1x1xf32, #tpu.memory_space<vmem>>, %arg8: memref<1x128xf32, #tpu.memory_space<vmem>>) attributes {dimension_semantics = [#tpu.dimension_semantics<parallel>], iteration_bounds = array<i64: 1>, scalar_prefetch = 0 : i64, scratch_operands = 0 : i64, tpu.core_type = #tpu.core_type<tc>, window_params = [{transform_indices = @transform_0, window_bounds = array<i64: 2, 128>}, {pipeline_mode = #tpu.pipeline_mode<synchronous>, transform_indices = @transform_1, window_bounds = array<i64: 32, 32>}, {pipeline_mode = #tpu.pipeline_mode<synchronous>, transform_indices = @transform_2, window_bounds = array<i64: 32, 1>}, {pipeline_mode = #tpu.pipeline_mode<synchronous>, transform_indices = @transform_3, window_bounds = array<i64: 16, 32>}, {pipeline_mode = #tpu.pipeline_mode<synchronous>, transform_indices = @transform_4, window_bounds = array<i64: 16, 1>}, {pipeline_mode = #tpu.pipeline_mode<synchronous>, transform_indices = @transform_5, window_bounds = array<i64: 16, 1>}, {pipeline_mode = #tpu.pipeline_mode<synchronous>, transform_indices = @transform_6, window_bounds = array<i64: 1, 1>}, {transform_indices = @transform_7, window_bounds = array<i64: 1, 128>}]} {
    %c0 = arith.constant 0 : index
    %c0_0 = arith.constant 0 : index
    %0 = vector.load %arg1[%c0, %c0_0] : memref<2x128xi32, #tpu.memory_space<vmem>>, vector<2x128xi32>
    %1 = tpu.iota {dimensions = array<i32: 0>} : vector<32x128xi32>
    %2 = vector.extract_strided_slice %0 {offsets = [0, 0], sizes = [1, 128], strides = [1, 1]} : vector<2x128xi32> to vector<1x128xi32>
    %3 = vector.broadcast %2 : vector<1x128xi32> to vector<32x128xi32>
    %4 = arith.cmpi eq, %1, %3 : vector<32x128xi32>
    %5 = vector.extract_strided_slice %0 {offsets = [1, 0], sizes = [1, 128], strides = [1, 1]} : vector<2x128xi32> to vector<1x128xi32>
    %6 = vector.broadcast %5 : vector<1x128xi32> to vector<32x128xi32>
    %7 = arith.cmpi eq, %1, %6 : vector<32x128xi32>
    %8 = arith.ori %4, %7 : vector<32x128xi1>
    %9 = arith.extui %8 : vector<32x128xi1> to vector<32x128xi32>
    %10 = arith.sitofp %9 : vector<32x128xi32> to vector<32x128xf32>
    %11 = arith.truncf %10 : vector<32x128xf32> to vector<32x128xbf16>
    %c0_1 = arith.constant 0 : index
    %c0_2 = arith.constant 0 : index
    %12 = vector.load %arg2[%c0_1, %c0_2] : memref<32x32xf32, #tpu.memory_space<vmem>>, vector<32x32xf32>
    %13 = arith.truncf %12 : vector<32x32xf32> to vector<32x32xbf16>
    %cst = arith.constant dense<0.000000e+00> : vector<32x128xf32>
    %14 = tpu.matmul %13, %11, %cst {dimension_numbers = #tpu.dot_dimension_numbers<[1], [0], [0], [1], [0, 0, 1, 1], [], []>} : vector<32x32xbf16>, vector<32x128xbf16>, vector<32x128xf32> -> vector<32x128xf32>
    %c0_3 = arith.constant 0 : index
    %c0_4 = arith.constant 0 : index
    %15 = vector.load %arg3[%c0_3, %c0_4] : memref<32x1xf32, #tpu.memory_space<vmem>>, vector<32x1xf32>
    %16 = vector.broadcast %15 : vector<32x1xf32> to vector<32x128xf32>
    %17 = arith.addf %14, %16 : vector<32x128xf32>
    %18 = arith.negf %17 : vector<32x128xf32>
    %19 = math.exp %18 : vector<32x128xf32>
    %cst_5 = arith.constant 1.000000e+00 : f32
    %20 = vector.broadcast %cst_5 : f32 to vector<32x128xf32>
    %21 = arith.addf %20, %19 : vector<32x128xf32>
    %22 = arith.divf %20, %21 : vector<32x128xf32>
    %23 = arith.mulf %17, %22 : vector<32x128xf32>
    %c0_6 = arith.constant 0 : index
    %c0_7 = arith.constant 0 : index
    %24 = vector.load %arg4[%c0_6, %c0_7] : memref<16x32xf32, #tpu.memory_space<vmem>>, vector<16x32xf32>
    %25 = arith.truncf %24 : vector<16x32xf32> to vector<16x32xbf16>
    %26 = arith.truncf %23 : vector<32x128xf32> to vector<32x128xbf16>
    %cst_8 = arith.constant dense<0.000000e+00> : vector<16x128xf32>
    %27 = tpu.matmul %25, %26, %cst_8 {dimension_numbers = #tpu.dot_dimension_numbers<[1], [0], [0], [1], [0, 0, 1, 1], [], []>} : vector<16x32xbf16>, vector<32x128xbf16>, vector<16x128xf32> -> vector<16x128xf32>
    %c0_9 = arith.constant 0 : index
    %c0_10 = arith.constant 0 : index
    %28 = vector.load %arg5[%c0_9, %c0_10] : memref<16x1xf32, #tpu.memory_space<vmem>>, vector<16x1xf32>
    %29 = vector.broadcast %28 : vector<16x1xf32> to vector<16x128xf32>
    %30 = arith.addf %27, %29 : vector<16x128xf32>
    %31 = arith.negf %30 : vector<16x128xf32>
    %32 = math.exp %31 : vector<16x128xf32>
    %cst_11 = arith.constant 1.000000e+00 : f32
    %33 = vector.broadcast %cst_11 : f32 to vector<16x128xf32>
    %34 = arith.addf %33, %32 : vector<16x128xf32>
    %35 = arith.divf %33, %34 : vector<16x128xf32>
    %36 = arith.mulf %30, %35 : vector<16x128xf32>
    %c0_12 = arith.constant 0 : index
    %c0_13 = arith.constant 0 : index
    %37 = vector.load %arg6[%c0_12, %c0_13] : memref<16x1xf32, #tpu.memory_space<vmem>>, vector<16x1xf32>
    %38 = vector.broadcast %37 : vector<16x1xf32> to vector<16x128xf32>
    %39 = arith.mulf %36, %38 : vector<16x128xf32>
    %cst_14 = arith.constant dense<0.000000e+00> : vector<128xf32>
    %40 = vector.multi_reduction <add>, %39, %cst_14 [0] : vector<16x128xf32> to vector<128xf32>
    %41 = vector.shape_cast %40 : vector<128xf32> to vector<1x128xf32>
    %c0_15 = arith.constant 0 : index
    %c0_16 = arith.constant 0 : index
    %42 = vector.load %arg7[%c0_15, %c0_16] : memref<1x1xf32, #tpu.memory_space<vmem>>, vector<1x1xf32>
    %43 = vector.broadcast %42 : vector<1x1xf32> to vector<1x128xf32>
    %44 = arith.addf %41, %43 : vector<1x128xf32>
    %45 = arith.negf %44 : vector<1x128xf32>
    %46 = math.exp %45 : vector<1x128xf32>
    %cst_17 = arith.constant 1.000000e+00 : f32
    %47 = vector.broadcast %cst_17 : f32 to vector<1x128xf32>
    %48 = arith.addf %47, %46 : vector<1x128xf32>
    %49 = arith.divf %47, %48 : vector<1x128xf32>
    %c0_18 = arith.constant 0 : index
    %c0_19 = arith.constant 0 : index
    %50 = vector.load %arg8[%c0_18, %c0_19] : memref<1x128xf32, #tpu.memory_space<vmem>>, vector<1x128xf32>
    tpu.vector_store %arg8[%c0_18, %c0_19], %49 {strides = array<i32>} : memref<1x128xf32, #tpu.memory_space<vmem>>, vector<1x128xf32>,
    return
  }
  func.func @transform_0(%arg0: i32) -> (i32, i32) {
    %c0_i32 = arith.constant 0 : i32
    %c0_i32_0 = arith.constant 0 : i32
    return %c0_i32, %arg0 : i32, i32
  }
  func.func @transform_1(%arg0: i32) -> (i32, i32) {
    %c0_i32 = arith.constant 0 : i32
    %c0_i32_0 = arith.constant 0 : i32
    %c0_i32_1 = arith.constant 0 : i32
    return %c0_i32, %c0_i32_0 : i32, i32
  }
  func.func @transform_2(%arg0: i32) -> (i32, i32) {
    %c0_i32 = arith.constant 0 : i32
    %c0_i32_0 = arith.constant 0 : i32
    %c0_i32_1 = arith.constant 0 : i32
    return %c0_i32, %c0_i32_0 : i32, i32
  }
  func.func @transform_3(%arg0: i32) -> (i32, i32) {
    %c0_i32 = arith.constant 0 : i32
    %c0_i32_0 = arith.constant 0 : i32
    %c0_i32_1 = arith.constant 0 : i32
    return %c0_i32, %c0_i32_0 : i32, i32
  }
  func.func @transform_4(%arg0: i32) -> (i32, i32) {
    %c0_i32 = arith.constant 0 : i32
    %c0_i32_0 = arith.constant 0 : i32
    %c0_i32_1 = arith.constant 0 : i32
    return %c0_i32, %c0_i32_0 : i32, i32
  }
  func.func @transform_5(%arg0: i32) -> (i32, i32) {
    %c0_i32 = arith.constant 0 : i32
    %c0_i32_0 = arith.constant 0 : i32
    %c0_i32_1 = arith.constant 0 : i32
    return %c0_i32, %c0_i32_0 : i32, i32
  }
  func.func @transform_6(%arg0: i32) -> (i32, i32) {
    %c0_i32 = arith.constant 0 : i32
    %c0_i32_0 = arith.constant 0 : i32
    %c0_i32_1 = arith.constant 0 : i32
    return %c0_i32, %c0_i32_0 : i32, i32
  }
  func.func @transform_7(%arg0: i32) -> (i32, i32) {
    %c0_i32 = arith.constant 0 : i32
    %c0_i32_0 = arith.constant 0 : i32
    return %c0_i32, %arg0 : i32, i32
  }
}

</mosaic_0001>

<llo_original>
// kernel: edge_encoder_forward.1
$region0: #{edge_encoder_forward.1}
  #allocation0 [shape = 'u32[]', space=smem, size = 0x4, offset = 0x4, fixed_abs, tag = 'smem constant byte address 0x4 - core index']
  #allocation1 [shape = 'u32[144,128]{1,0:T(1,128)}', space=vmem, size = 0x12000, scoped, tag = 'internal scratch']
  #allocation2 [shape = 'f32[1,1]{1,0:T(1,128)S(1)}', space=vmem, size = 0x200, scoped, tag = 'scoped memory for edge_encoder_forward.1']
  %s0 = inlined_call_operand.vmem [shape: s32[2,128], index: 0, kind: input, shape index: {}]
  %s1 = inlined_call_operand.vmem [shape: f32[32,32], index: 1, kind: input, shape index: {}]
  %s2 = inlined_call_operand.vmem [shape: f32[32,1], index: 2, kind: input, shape index: {}]
  %s3 = inlined_call_operand.vmem [shape: f32[16,32], index: 3, kind: input, shape index: {}]
  %s4 = inlined_call_operand.vmem [shape: f32[16,1], index: 4, kind: input, shape index: {}]
  %s5 = inlined_call_operand.vmem [shape: f32[16,1], index: 5, kind: input, shape index: {}]
  %s6 = inlined_call_operand.<no memory space> [shape: f32[1,1], index: 6, kind: input, shape index: {}]
  %s7 = inlined_call_operand.vmem [shape: f32[1,128], index: 7, kind: output, shape index: {}]
  %s8 = sld [smem:[#allocation0]]
  $region38: #{edge_encoder_forward.1} parent=0
    _
  %s10 = ssub.s32 1, %s8
  %s11 = scalar_select 0, %s10, %s8
  %v12 = vstv %s6
  %13 = vst [vmem:[#allocation2] sm:$0x1] %v12
  // Predicated region
  $region2: #{edge_encoder_forward.1} parent=0 // pred_check
    _
  $region3: #{edge_encoder_forward.1} parent=0 // pred_check_branch
    %15 = sbr.rel (0) target = $region5
  $region4: #{edge_encoder_forward.1} parent=0 // pred_region
    _
  $region5: #{edge_encoder_forward.1} parent=0 // pred_fallthru
    _
  // Predicated region
  $region6: #{edge_encoder_forward.1} parent=0 // pred_check
    _
  $region7: #{edge_encoder_forward.1} parent=0 // pred_check_branch
    %17 = sbr.rel (0) target = $region9
  $region8: #{edge_encoder_forward.1} parent=0 // pred_region
    _
  $region9: #{edge_encoder_forward.1} parent=0 // pred_fallthru
    _
  // Predicated region
  $region10: #{edge_encoder_forward.1} parent=0 // pred_check
    _
  $region11: #{edge_encoder_forward.1} parent=0 // pred_check_branch
    %19 = sbr.rel (0) target = $region13
  $region12: #{edge_encoder_forward.1} parent=0 // pred_region
    _
  $region13: #{edge_encoder_forward.1} parent=0 // pred_fallthru
    _
  // Predicated region
  $region14: #{edge_encoder_forward.1} parent=0 // pred_check
    _
  $region15: #{edge_encoder_forward.1} parent=0 // pred_check_branch
    %21 = sbr.rel (0) target = $region17
  $region16: #{edge_encoder_forward.1} parent=0 // pred_region
    _
  $region17: #{edge_encoder_forward.1} parent=0 // pred_fallthru
    _
  // Predicated region
  $region18: #{edge_encoder_forward.1} parent=0 // pred_check
    _
  $region19: #{edge_encoder_forward.1} parent=0 // pred_check_branch
    %23 = sbr.rel (0) target = $region21
  $region20: #{edge_encoder_forward.1} parent=0 // pred_region
    _
  $region21: #{edge_encoder_forward.1} parent=0 // pred_fallthru
    _
  // Predicated region
  $region22: #{edge_encoder_forward.1} parent=0 // pred_check
    _
  $region23: #{edge_encoder_forward.1} parent=0 // pred_check_branch
    %25 = sbr.rel (0) target = $region25
  $region24: #{edge_encoder_forward.1} parent=0 // pred_region
    _
  $region25: #{edge_encoder_forward.1} parent=0 // pred_fallthru
    _
  // Predicated region
  $region26: #{edge_encoder_forward.1} parent=0 // pred_check
    _
  $region27: #{edge_encoder_forward.1} parent=0 // pred_check_branch
    %27 = sbr.rel (0) target = $region29
  $region28: #{edge_encoder_forward.1} parent=0 // pred_region
    _
  $region29: #{edge_encoder_forward.1} parent=0 // pred_fallthru
    _
  %v29 = vld [vmem:[%s0] sm:$0x3]
  %v30 = vlaneseq
  %v31 = vshrl.u32 %v30, 7
  %v32 = vadd.s32 %v31, 8
  %v33 = vadd.s32 %v31, 16
  %v34 = vadd.s32 %v31, 24
  %v35 = vlaneseq
  %v36 = vshrl.u32 %v35, 7
  %v37 = vsub.s32 0, %v36
  %v38 = vrot.slane %v29, %v37
  %vm39 = vcmp.eq.s32.totalorder %v31, %v38
  %vm40 = vcmp.eq.s32.totalorder %v32, %v38
  %vm41 = vcmp.eq.s32.totalorder %v33, %v38
  %vm42 = vcmp.eq.s32.totalorder %v34, %v38
  %v43 = vlaneseq
  %v44 = vshrl.u32 %v43, 7
  %v45 = vsub.s32 1, %v44
  %v46 = vrot.slane %v29, %v45
  %vm47 = vcmp.eq.s32.totalorder %v31, %v46
  %vm48 = vcmp.eq.s32.totalorder %v32, %v46
  %vm49 = vcmp.eq.s32.totalorder %v33, %v46
  %vm50 = vcmp.eq.s32.totalorder %v34, %v46
  %vm51 = vmor %vm39, %vm47
  %vm52 = vmor %vm40, %vm48
  %vm53 = vmor %vm41, %vm49
  %vm54 = vmor %vm42, %vm50
  %v55 = vsel %vm51, 1, 0
  %v56 = vsel %vm52, 1, 0
  %v57 = vsel %vm53, 1, 0
  %v58 = vsel %vm54, 1, 0
  %v59 = vcvt.s32.f32 %v55
  %v60 = vcvt.s32.f32 %v56
  %v61 = vcvt.s32.f32 %v57
  %v62 = vcvt.s32.f32 %v58
  %v63 = vpack.c.bf16 %v60, %v59
  %v64 = vpack.c.bf16 %v62, %v61
  %v65 = vld [vmem:[%s1] sm:$0xff]
  %v66 = vld [vmem:[%s1 + $0x8] sm:$0xff]
  %v67 = vld [vmem:[%s1 + $0x10] sm:$0xff]
  %v68 = vld [vmem:[%s1 + $0x18] sm:$0xff]
  %v69 = vpack.c.bf16 %v66, %v65
  %v70 = vpack.c.bf16 %v68, %v67
  %v71 = vld [vmem:[%s2] sm:$0xff]
  %v72 = vld [vmem:[%s2 + $0x8] sm:$0xff]
  %v73 = vld [vmem:[%s2 + $0x10] sm:$0xff]
  %v74 = vld [vmem:[%s2 + $0x18] sm:$0xff]
  %76 = vset.pattern.permute.xlu0 0
  %77 = vperm.xlu0 %76, %v71
  %v78 = vpop.permute.xlu0 %77
  %81 = vset.pattern.permute.xlu0 0
  %82 = vperm.xlu0 %81, %v72
  %v83 = vpop.permute.xlu0 %82
  %86 = vset.pattern.permute.xlu0 0
  %87 = vperm.xlu0 %86, %v73
  %v88 = vpop.permute.xlu0 %87
  %91 = vset.pattern.permute.xlu0 0
  %92 = vperm.xlu0 %91, %v74
  %v93 = vpop.permute.xlu0 %92
  %vm95 = vcmask 261120
  %v97 = vsel %vm95, %v69, 0
  %v100 = vsel %vm95, %v70, 0
  %102 = vmatprep.subr.bf16.mxu0 0
  %103 = vmatpush1.bf16.msra.mxu0 0
  %104 = vmatprep.subr.bf16.mxu0 0
  %105 = vmatpush1.bf16.msra.mxu0 0
  %106 = vmatprep.subr.bf16.mxu0 0
  %107 = vmatpush1.bf16.msra.mxu0 0
  %108 = vmatprep.subr.bf16.mxu0 0
  %109 = vmatpush1.bf16.msra.mxu0 0
  %110 = vmatprep.subr.bf16.mxu0 0
  %111 = vmatpush1.bf16.msra.mxu0 0
  %112 = vmatprep.subr.bf16.mxu0 0
  %113 = vmatpush1.bf16.msra.mxu0 0
  %114 = vmatprep.subr.bf16.mxu0 0
  %115 = vmatpush1.bf16.msra.mxu0 %v64
  %116 = vmatprep.subr.bf16.mxu0 0
  %117 = vmatpush1.bf16.msra.mxu0 %v63
  %118 = vmatprep.subr.bf16.mxu0 0
  %119 = vmatpush2.bf16.msra.mxu0 0
  %120 = vmatprep.subr.bf16.mxu0 0
  %121 = vmatpush2.bf16.msra.mxu0 0
  %122 = vmatprep.subr.bf16.mxu0 0
  %123 = vmatpush2.bf16.msra.mxu0 0
  %124 = vmatprep.subr.bf16.mxu0 0
  %125 = vmatpush2.bf16.msra.mxu0 0
  %126 = vmatprep.subr.bf16.mxu0 0
  %127 = vmatpush2.bf16.msra.mxu0 0
  %128 = vmatprep.subr.bf16.mxu0 0
  %129 = vmatpush2.bf16.msra.mxu0 0
  %130 = vmatprep.subr.bf16.mxu0 0
  %131 = vmatpush2.bf16.msra.mxu0 0
  %132 = vmatprep.subr.bf16.mxu0 0
  %133 = vmatpush2.bf16.msra.mxu0 0
  %134 = vmatprep.mubr.bf16.mxu0 0
  %135 = vmatmul.mubr.bf16.gmra.mxu0 %v97
  %v136 = vpop.f32.mrf.mxu0
  %v137 = vadd.f32 %v78, %v136
  %v138 = vpop.f32.mrf.mxu0
  %v139 = vpop.f32.mrf.mxu0
  %v140 = vadd.f32 %v83, %v139
  %v141 = vpop.f32.mrf.mxu0
  %142 = vmatprep.mubr.bf16.mxu0 0
  %143 = vmatmul.mubr.bf16.gmra.mxu0 %v100
  %v144 = vpop.f32.mrf.mxu0
  %v145 = vadd.f32 %v88, %v144
  %v146 = vpop.f32.mrf.mxu0
  %v147 = vpop.f32.mrf.mxu0
  %v148 = vadd.f32 %v93, %v147
  %v149 = vpop.f32.mrf.mxu0
  %150 = vdwg.mxu0
  %v151 = vxor.u32 %v137, 2147483648
  %v152 = vxor.u32 %v140, 2147483648
  %v153 = vxor.u32 %v145, 2147483648
  %v154 = vxor.u32 %v148, 2147483648
  %v155 = vmul.f32 %v151, 1.442695
  %v156 = vpow.pop %v155
  %v157 = vmul.f32 %v152, 1.442695
  %v158 = vpow.pop %v157
  %v159 = vmul.f32 %v153, 1.442695
  %v160 = vpow.pop %v159
  %v161 = vmul.f32 %v154, 1.442695
  %v162 = vpow.pop %v161
  %v163 = vadd.f32 %v156, 1.0
  %v164 = vadd.f32 %v158, 1.0
  %v165 = vadd.f32 %v160, 1.0
  %v166 = vadd.f32 %v162, 1.0
  %v167 = vrcp.pop %v163
  %v168 = vmul.f32 1.0, %v167
  %v169 = vrcp.pop %v164
  %v170 = vmul.f32 1.0, %v169
  %v171 = vrcp.pop %v165
  %v172 = vmul.f32 1.0, %v171
  %v173 = vrcp.pop %v166
  %v174 = vmul.f32 1.0, %v173
  %v175 = vmul.f32 %v137, %v168
  %v176 = vmul.f32 %v140, %v170
  %v177 = vmul.f32 %v145, %v172
  %v178 = vmul.f32 %v148, %v174
  %v179 = vld [vmem:[%s3] sm:$0xff]
  %v180 = vld [vmem:[%s3 + $0x8] sm:$0xff]
  %v181 = vpack.c.bf16 %v180, %v179
  %v182 = vpack.c.bf16 %v176, %v175
  %v183 = vpack.c.bf16 %v178, %v177
  %v184 = vld [vmem:[%s4] sm:$0xff]
  %v185 = vld [vmem:[%s4 + $0x8] sm:$0xff]
  %187 = vset.pattern.permute.xlu0 0
  %188 = vperm.xlu0 %187, %v184
  %v189 = vpop.permute.xlu0 %188
  %192 = vset.pattern.permute.xlu0 0
  %193 = vperm.xlu0 %192, %v185
  %v194 = vpop.permute.xlu0 %193
  %v197 = vsel %vm95, %v181, 0
  %199 = vmatprep.subr.bf16.mxu0 0
  %200 = vmatpush1.bf16.msra.mxu0 0
  %201 = vmatprep.subr.bf16.mxu0 0
  %202 = vmatpush1.bf16.msra.mxu0 0
  %203 = vmatprep.subr.bf16.mxu0 0
  %204 = vmatpush1.bf16.msra.mxu0 0
  %205 = vmatprep.subr.bf16.mxu0 0
  %206 = vmatpush1.bf16.msra.mxu0 0
  %207 = vmatprep.subr.bf16.mxu0 0
  %208 = vmatpush1.bf16.msra.mxu0 0
  %209 = vmatprep.subr.bf16.mxu0 0
  %210 = vmatpush1.bf16.msra.mxu0 0
  %211 = vmatprep.subr.bf16.mxu0 0
  %212 = vmatpush1.bf16.msra.mxu0 %v183
  %213 = vmatprep.subr.bf16.mxu0 0
  %214 = vmatpush1.bf16.msra.mxu0 %v182
  %215 = vmatprep.subr.bf16.mxu0 0
  %216 = vmatpush2.bf16.msra.mxu0 0
  %217 = vmatprep.subr.bf16.mxu0 0
  %218 = vmatpush2.bf16.msra.mxu0 0
  %219 = vmatprep.subr.bf16.mxu0 0
  %220 = vmatpush2.bf16.msra.mxu0 0
  %221 = vmatprep.subr.bf16.mxu0 0
  %222 = vmatpush2.bf16.msra.mxu0 0
  %223 = vmatprep.subr.bf16.mxu0 0
  %224 = vmatpush2.bf16.msra.mxu0 0
  %225 = vmatprep.subr.bf16.mxu0 0
  %226 = vmatpush2.bf16.msra.mxu0 0
  %227 = vmatprep.subr.bf16.mxu0 0
  %228 = vmatpush2.bf16.msra.mxu0 0
  %229 = vmatprep.subr.bf16.mxu0 0
  %230 = vmatpush2.bf16.msra.mxu0 0
  %231 = vmatprep.mubr.bf16.mxu0 0
  %232 = vmatmul.mubr.bf16.gmra.mxu0 %v197
  %v233 = vpop.f32.mrf.mxu0
  %v234 = vadd.f32 %v189, %v233
  %v235 = vpop.f32.mrf.mxu0
  %v236 = vpop.f32.mrf.mxu0
  %v237 = vadd.f32 %v194, %v236
  %v238 = vpop.f32.mrf.mxu0
  %239 = vdwg.mxu0
  %v240 = vxor.u32 %v234, 2147483648
  %v241 = vxor.u32 %v237, 2147483648
  %v242 = vmul.f32 %v240, 1.442695
  %v243 = vpow.pop %v242
  %v244 = vmul.f32 %v241, 1.442695
  %v245 = vpow.pop %v244
  %v246 = vadd.f32 %v243, 1.0
  %v247 = vadd.f32 %v245, 1.0
  %v248 = vrcp.pop %v246
  %v249 = vmul.f32 1.0, %v248
  %v250 = vrcp.pop %v247
  %v251 = vmul.f32 1.0, %v250
  %v252 = vmul.f32 %v234, %v249
  %v253 = vmul.f32 %v237, %v251
  %v254 = vld [vmem:[%s5] sm:$0xff]
  %v255 = vld [vmem:[%s5 + $0x8] sm:$0xff]
  %257 = vset.pattern.permute.xlu0 0
  %258 = vperm.xlu0 %257, %v254
  %v259 = vpop.permute.xlu0 %258
  %262 = vset.pattern.permute.xlu0 0
  %263 = vperm.xlu0 %262, %v255
  %v264 = vpop.permute.xlu0 %263
  %v266 = vmul.f32 %v252, %v259
  %v267 = vmul.f32 %v253, %v264
  %v268 = vadd.f32 %v266, %v267
  %v269 = vrot.slane %v268, 4
  %v270 = vadd.f32 %v268, %v269
  %v271 = vrot.slane %v270, 2
  %v272 = vadd.f32 %v270, %v271
  %v273 = vrot.slane %v272, 1
  %v274 = vadd.f32 %v272, %v273
  %v275 = vld [vmem:[#allocation2] sm:$0x1]
  %277 = vset.pattern.permute.xlu0 0
  %278 = vperm.xlu0 %277, %v275
  %v279 = vpop.permute.xlu0 %278
  %v281 = vlaneseq
  %v282 = vshrl.u32 %v281, 7
  %v283 = vsub.s32 0, %v282
  %v284 = vrot.slane %v279, %v283
  %v285 = vadd.f32 %v274, %v284
  %v286 = vxor.u32 %v285, 2147483648
  %v287 = vmul.f32 %v286, 1.442695
  %v288 = vpow.pop %v287
  %v289 = vadd.f32 %v288, 1.0
  %v290 = vrcp.pop %v289
  %v291 = vmul.f32 1.0, %v290
  %292 = vst [vmem:[%s7] sm:$0x1] %v291
  // Predicated region
  $region30: #{edge_encoder_forward.1} parent=0 // pred_check
    _
  $region31: #{edge_encoder_forward.1} parent=0 // pred_check_branch
    %294 = sbr.rel (0) target = $region33
  $region32: #{edge_encoder_forward.1} parent=0 // pred_region
    _
  $region33: #{edge_encoder_forward.1} parent=0 // pred_fallthru
    _
  // Predicated region
  $region34: #{edge_encoder_forward.1} parent=0 // pred_check
    _
  $region35: #{edge_encoder_forward.1} parent=0 // pred_check_branch
    %296 = sbr.rel (0) target = $region37
  $region36: #{edge_encoder_forward.1} parent=0 // pred_region
    _
  $region37: #{edge_encoder_forward.1} parent=0 // pred_fallthru
    _

</llo_original>
